<compile_context>
chip_gen: v6e
topology: v6e:2x2x1
jax: 0.10.0
libtpu: 0.0.40
codegen_flags: <defaults>
</compile_context>

<pallas_src>
import functools

import numpy as np
import jax
import jax.numpy as jnp
from jax import lax
from jax.experimental import pallas as pl
from jax.experimental.pallas import tpu as pltpu

EPS = 1e-5
_LANES = 128


# ----------------------------------------------------------------------------
# Static layout: one [8, 128] block per 1-row parameter, 8-sublane aligned.
# ----------------------------------------------------------------------------
def _dims_from_params(params):
    in_f = int(params["w1"].shape[1])
    hid = tuple(int(params[f"w{i}"].shape[0]) for i in (1, 2, 3, 4))
    out_f = int(params["w5"].shape[0])
    return (in_f,) + hid + (out_f,)


def _make_layout(dims):
    names = []
    in_dims = dims[:-1]                      # input width of each of 5 layers
    for i in range(1, 6):
        for k in range(in_dims[i - 1]):
            names.append(f"w{i}r{k}")        # row k of W_i^T, sublane-replicated
        names.append(f"b{i}")
    for i in range(1, 5):
        names.append(f"g{i}")
        names.append(f"be{i}")
    layout = {n: 8 * idx for idx, n in enumerate(names)}
    return layout, 8 * len(names)


def pack_params(params):
    """Pack all 19 parameter tensors into one lane-dense f32 slab (host-side,
    call once per parameter set)."""
    dims = _dims_from_params(params)
    layout, n_rows = _make_layout(dims)
    slab = np.zeros((n_rows, _LANES), np.float32)
    for i in range(1, 6):
        w = np.asarray(params[f"w{i}"], np.float32)      # [out, in]
        b = np.asarray(params[f"b{i}"], np.float32)      # [out]
        for k in range(w.shape[1]):
            r0 = layout[f"w{i}r{k}"]
            slab[r0:r0 + 8, :w.shape[0]] = w[:, k][None, :]   # row k of W^T
        r0 = layout[f"b{i}"]
        slab[r0:r0 + 8, :b.shape[0]] = b[None, :]
    for i in range(1, 5):
        g = np.asarray(params[f"g{i}"], np.float32)
        be = np.asarray(params[f"be{i}"], np.float32)
        slab[layout[f"g{i}"]:layout[f"g{i}"] + 8, :g.shape[0]] = g[None, :]
        slab[layout[f"be{i}"]:layout[f"be{i}"] + 8, :be.shape[0]] = be[None, :]
    return jnp.asarray(slab)


# ----------------------------------------------------------------------------
# Kernel builder (bn_model, layout, dims, B are static Python values).
# ----------------------------------------------------------------------------
def _make_kernel(bn_model, layout, dims, batch_size, b_pad):
    in_dims = dims[:-1]
    inv_b = 1.0 / float(batch_size)
    need_mask = (b_pad != batch_size)

    def kernel(x_ref, p_ref, o_ref):
        def blk(name):
            r0 = layout[name]
            b = p_ref[r0:r0 + 8, :]                  # aligned [8, 128] vld
            if b_pad != 8:                           # fallback for larger B
                b = jnp.broadcast_to(b[0:1, :], (b_pad, _LANES))
            return b

        def linear(h, i, with_bias=True):
            nin = in_dims[i - 1]
            acc = h[:, 0:1] * blk(f"w{i}r0")
            for k in range(1, nin):
                acc = acc + h[:, k:k + 1] * blk(f"w{i}r{k}")
            if with_bias:
                acc = acc + blk(f"b{i}")
            return acc

        if need_mask:
            rows = lax.broadcasted_iota(jnp.int32, (b_pad, _LANES), 0)
            mask = (rows < batch_size).astype(jnp.float32)

        def batchnorm(z, i):
            zs = z * mask if need_mask else z
            # Two independent axis-0 reductions (overlap across XLUs).
            mean = jnp.sum(zs, axis=0, keepdims=True) * inv_b
            e2 = jnp.sum(zs * zs, axis=0, keepdims=True) * inv_b
            var = jnp.maximum(e2 - mean * mean, 0.0)   # guard cancellation
            inv_std = lax.rsqrt(var + EPS)             # EUP rsqrt
            return (z - mean) * inv_std * blk(f"g{i}") + blk(f"be{i}")

        h = x_ref[...]                                  # [b_pad, 128], f32

        if bn_model is None:
            for i in (1, 2, 3, 4):
                h = jnp.maximum(linear(h, i), 0.0)
            out = linear(h, 5)
        elif bn_model == "pre":
            for i in (1, 2, 3, 4):
                # Linear bias is cancelled exactly by BN mean subtraction.
                h = jnp.maximum(batchnorm(linear(h, i, with_bias=False), i), 0.0)
            out = linear(h, 5)
        elif bn_model == "post":
            h = jnp.maximum(linear(h, 1), 0.0)
            for i in (2, 3, 4):
                h = jnp.maximum(linear(batchnorm(h, i - 1), i), 0.0)
            out = linear(batchnorm(h, 4), 5)
        else:
            raise ValueError(f"unknown BN_model: {bn_model!r}")

        o_ref[...] = out                                # full [b_pad,128] store

    return kernel


# ----------------------------------------------------------------------------
# Cached compiled forward (one per (bn_model, batch, dims)).
# ----------------------------------------------------------------------------
@functools.lru_cache(maxsize=None)
def _build_forward(bn_model, batch_size, dims):
    in_f, out_f = dims[0], dims[-1]
    b_pad = ((batch_size + 7) // 8) * 8
    layout, _ = _make_layout(dims)
    kernel = _make_kernel(bn_model, layout, dims, batch_size, b_pad)

    vmem = pl.BlockSpec(memory_space=pltpu.MemorySpace.VMEM)
    call = pl.pallas_call(
        kernel,
        out_shape=jax.ShapeDtypeStruct((b_pad, _LANES), jnp.float32),
        in_specs=[vmem, vmem],
        out_specs=vmem,
    )

    @jax.jit
    def fwd(x, slab):
        xp = jnp.zeros((b_pad, _LANES), jnp.float32)
        xp = xp.at[:batch_size, :in_f].set(x.astype(jnp.float32))
        out = call(xp, slab)
        return out[:batch_size, :out_f]

    return fwd


class Net4Pallas:
    """Packs parameters once; reuses the cached compiled kernel per call."""

    def __init__(self, params, bn_model=None):
        self.bn_model = bn_model
        self.dims = _dims_from_params(params)
        self.slab = pack_params(params)

    def __call__(self, x):
        fwd = _build_forward(self.bn_model, int(x.shape[0]), self.dims)
        return fwd(x, self.slab)


def net_class4_forward(x, params, bn_model=None):
    """Functional convenience API (packs per call; prefer Net4Pallas)."""
    dims = _dims_from_params(params)
    fwd = _build_forward(bn_model, int(x.shape[0]), dims)
    return fwd(x, pack_params(params))


# ----------------------------------------------------------------------------
# Parameter init (PyTorch nn.Linear defaults: U(-k,k), k=1/sqrt(fan_in);
# BatchNorm: gamma=1, beta=0) and a pure-JAX reference for verification.
# ----------------------------------------------------------------------------
def init_params(key, in_features=2, n_hidden=(4, 4, 4, 4), out_features=1):
    dims = (in_features,) + tuple(n_hidden) + (out_features,)
    keys = jax.random.split(key, len(dims) - 1)
    params = {}
    for i, k in enumerate(keys, start=1):
        fan_in, fan_out = dims[i - 1], dims[i]
        kw, kb = jax.random.split(k)
        bound = 1.0 / (fan_in ** 0.5)
        params[f"w{i}"] = jax.random.uniform(
            kw, (fan_out, fan_in), jnp.float32, -bound, bound)
        params[f"b{i}"] = jax.random.uniform(
            kb, (fan_out,), jnp.float32, -bound, bound)
    for i in range(1, 5):
        params[f"g{i}"] = jnp.ones((n_hidden[i - 1],), jnp.float32)
        params[f"be{i}"] = jnp.zeros((n_hidden[i - 1],), jnp.float32)
    return params


def _reference_forward(x, params, bn_model):
    def lin(h, i):
        return h @ params[f"w{i}"].T + params[f"b{i}"]

    def bn(z, i):
        m = jnp.mean(z, axis=0, keepdims=True)
        v = jnp.mean((z - m) ** 2, axis=0, keepdims=True)
        return (z - m) / jnp.sqrt(v + EPS) * params[f"g{i}"] + params[f"be{i}"]

    h = x
    if bn_model is None:
        for i in (1, 2, 3, 4):
            h = jnp.maximum(lin(h, i), 0.0)
        return lin(h, 5)
    if bn_model == "pre":
        for i in (1, 2, 3, 4):
            h = jnp.maximum(bn(lin(h, i), i), 0.0)
        return lin(h, 5)
    if bn_model == "post":
        h = jnp.maximum(lin(h, 1), 0.0)
        for i in (2, 3, 4):
            h = jnp.maximum(lin(bn(h, i - 1), i), 0.0)
        return lin(bn(h, 4), 5)
    raise ValueError(bn_model)


if __name__ == "__main__":
    key = jax.random.PRNGKey(0)
    k_params, k_x = jax.random.split(key)

    B, IN = 8, 2
    params = init_params(k_params, in_features=IN)
    x = jax.random.normal(k_x, (B, IN), jnp.float32)

    # TODO(synk): BatchNorm running_mean/running_var (momentum) buffer updates
    # are not implemented; this is a forward-only kernel using batch stats.
    for mode in (None, "pre", "post"):
        net = Net4Pallas(params, bn_model=mode)
        out = net(x)                       # first call: compile + run
        out = net(x)                       # second call: cached kernel path
        jax.block_until_ready(out)
        assert out.shape == (B, 1), (mode, out.shape)
        assert out.dtype == jnp.float32
        ref = _reference_forward(x, params, mode)
        assert bool(jnp.all(jnp.isfinite(out)))
        assert jnp.allclose(out, ref, atol=1e-4, rtol=1e-4), (
            mode, jnp.max(jnp.abs(out - ref)))

    print("KERNEL_OK")
</pallas_src>

<mosaic_0001>
module attributes {stable_mosaic.version = 11 : i64} {
  func.func @kernel(%arg0: memref<8x128xf32, #tpu.memory_space<vmem>>, %arg1: memref<248x128xf32, #tpu.memory_space<vmem>>, %arg2: memref<8x128xf32, #tpu.memory_space<vmem>>) attributes {dimension_semantics = [], scalar_prefetch = 0 : i64, scratch_operands = 0 : i64, tpu.core_type = #tpu.core_type<tc>} {
    %c0 = arith.constant 0 : index
    %c0_0 = arith.constant 0 : index
    %0 = vector.load %arg0[%c0, %c0_0] : memref<8x128xf32, #tpu.memory_space<vmem>>, vector<8x128xf32>
    %1 = vector.extract_strided_slice %0 {offsets = [0, 0], sizes = [8, 1], strides = [1, 1]} : vector<8x128xf32> to vector<8x1xf32>
    %c0_1 = arith.constant 0 : index
    %c0_2 = arith.constant 0 : index
    %2 = vector.load %arg1[%c0_1, %c0_2] : memref<248x128xf32, #tpu.memory_space<vmem>>, vector<8x128xf32>
    %3 = vector.broadcast %1 : vector<8x1xf32> to vector<8x128xf32>
    %4 = arith.mulf %3, %2 : vector<8x128xf32>
    %5 = vector.extract_strided_slice %0 {offsets = [0, 1], sizes = [8, 1], strides = [1, 1]} : vector<8x128xf32> to vector<8x1xf32>
    %c8 = arith.constant 8 : index
    %c0_3 = arith.constant 0 : index
    %6 = vector.load %arg1[%c8, %c0_3] : memref<248x128xf32, #tpu.memory_space<vmem>>, vector<8x128xf32>
    %7 = vector.broadcast %5 : vector<8x1xf32> to vector<8x128xf32>
    %8 = arith.mulf %7, %6 : vector<8x128xf32>
    %9 = arith.addf %4, %8 : vector<8x128xf32>
    %c16 = arith.constant 16 : index
    %c0_4 = arith.constant 0 : index
    %10 = vector.load %arg1[%c16, %c0_4] : memref<248x128xf32, #tpu.memory_space<vmem>>, vector<8x128xf32>
    %11 = arith.addf %9, %10 : vector<8x128xf32>
    %cst = arith.constant 0.000000e+00 : f32
    %12 = vector.broadcast %cst : f32 to vector<8x128xf32>
    %13 = arith.maximumf %11, %12 : vector<8x128xf32>
    %14 = vector.extract_strided_slice %13 {offsets = [0, 0], sizes = [8, 1], strides = [1, 1]} : vector<8x128xf32> to vector<8x1xf32>
    %c24 = arith.constant 24 : index
    %c0_5 = arith.constant 0 : index
    %15 = vector.load %arg1[%c24, %c0_5] : memref<248x128xf32, #tpu.memory_space<vmem>>, vector<8x128xf32>
    %16 = vector.broadcast %14 : vector<8x1xf32> to vector<8x128xf32>
    %17 = arith.mulf %16, %15 : vector<8x128xf32>
    %18 = vector.extract_strided_slice %13 {offsets = [0, 1], sizes = [8, 1], strides = [1, 1]} : vector<8x128xf32> to vector<8x1xf32>
    %c32 = arith.constant 32 : index
    %c0_6 = arith.constant 0 : index
    %19 = vector.load %arg1[%c32, %c0_6] : memref<248x128xf32, #tpu.memory_space<vmem>>, vector<8x128xf32>
    %20 = vector.broadcast %18 : vector<8x1xf32> to vector<8x128xf32>
    %21 = arith.mulf %20, %19 : vector<8x128xf32>
    %22 = arith.addf %17, %21 : vector<8x128xf32>
    %23 = vector.extract_strided_slice %13 {offsets = [0, 2], sizes = [8, 1], strides = [1, 1]} : vector<8x128xf32> to vector<8x1xf32>
    %c40 = arith.constant 40 : index
    %c0_7 = arith.constant 0 : index
    %24 = vector.load %arg1[%c40, %c0_7] : memref<248x128xf32, #tpu.memory_space<vmem>>, vector<8x128xf32>
    %25 = vector.broadcast %23 : vector<8x1xf32> to vector<8x128xf32>
    %26 = arith.mulf %25, %24 : vector<8x128xf32>
    %27 = arith.addf %22, %26 : vector<8x128xf32>
    %28 = vector.extract_strided_slice %13 {offsets = [0, 3], sizes = [8, 1], strides = [1, 1]} : vector<8x128xf32> to vector<8x1xf32>
    %c48 = arith.constant 48 : index
    %c0_8 = arith.constant 0 : index
    %29 = vector.load %arg1[%c48, %c0_8] : memref<248x128xf32, #tpu.memory_space<vmem>>, vector<8x128xf32>
    %30 = vector.broadcast %28 : vector<8x1xf32> to vector<8x128xf32>
    %31 = arith.mulf %30, %29 : vector<8x128xf32>
    %32 = arith.addf %27, %31 : vector<8x128xf32>
    %c56 = arith.constant 56 : index
    %c0_9 = arith.constant 0 : index
    %33 = vector.load %arg1[%c56, %c0_9] : memref<248x128xf32, #tpu.memory_space<vmem>>, vector<8x128xf32>
    %34 = arith.addf %32, %33 : vector<8x128xf32>
    %cst_10 = arith.constant 0.000000e+00 : f32
    %35 = vector.broadcast %cst_10 : f32 to vector<8x128xf32>
    %36 = arith.maximumf %34, %35 : vector<8x128xf32>
    %37 = vector.extract_strided_slice %36 {offsets = [0, 0], sizes = [8, 1], strides = [1, 1]} : vector<8x128xf32> to vector<8x1xf32>
    %c64 = arith.constant 64 : index
    %c0_11 = arith.constant 0 : index
    %38 = vector.load %arg1[%c64, %c0_11] : memref<248x128xf32, #tpu.memory_space<vmem>>, vector<8x128xf32>
    %39 = vector.broadcast %37 : vector<8x1xf32> to vector<8x128xf32>
    %40 = arith.mulf %39, %38 : vector<8x128xf32>
    %41 = vector.extract_strided_slice %36 {offsets = [0, 1], sizes = [8, 1], strides = [1, 1]} : vector<8x128xf32> to vector<8x1xf32>
    %c72 = arith.constant 72 : index
    %c0_12 = arith.constant 0 : index
    %42 = vector.load %arg1[%c72, %c0_12] : memref<248x128xf32, #tpu.memory_space<vmem>>, vector<8x128xf32>
    %43 = vector.broadcast %41 : vector<8x1xf32> to vector<8x128xf32>
    %44 = arith.mulf %43, %42 : vector<8x128xf32>
    %45 = arith.addf %40, %44 : vector<8x128xf32>
    %46 = vector.extract_strided_slice %36 {offsets = [0, 2], sizes = [8, 1], strides = [1, 1]} : vector<8x128xf32> to vector<8x1xf32>
    %c80 = arith.constant 80 : index
    %c0_13 = arith.constant 0 : index
    %47 = vector.load %arg1[%c80, %c0_13] : memref<248x128xf32, #tpu.memory_space<vmem>>, vector<8x128xf32>
    %48 = vector.broadcast %46 : vector<8x1xf32> to vector<8x128xf32>
    %49 = arith.mulf %48, %47 : vector<8x128xf32>
    %50 = arith.addf %45, %49 : vector<8x128xf32>
    %51 = vector.extract_strided_slice %36 {offsets = [0, 3], sizes = [8, 1], strides = [1, 1]} : vector<8x128xf32> to vector<8x1xf32>
    %c88 = arith.constant 88 : index
    %c0_14 = arith.constant 0 : index
    %52 = vector.load %arg1[%c88, %c0_14] : memref<248x128xf32, #tpu.memory_space<vmem>>, vector<8x128xf32>
    %53 = vector.broadcast %51 : vector<8x1xf32> to vector<8x128xf32>
    %54 = arith.mulf %53, %52 : vector<8x128xf32>
    %55 = arith.addf %50, %54 : vector<8x128xf32>
    %c96 = arith.constant 96 : index
    %c0_15 = arith.constant 0 : index
    %56 = vector.load %arg1[%c96, %c0_15] : memref<248x128xf32, #tpu.memory_space<vmem>>, vector<8x128xf32>
    %57 = arith.addf %55, %56 : vector<8x128xf32>
    %cst_16 = arith.constant 0.000000e+00 : f32
    %58 = vector.broadcast %cst_16 : f32 to vector<8x128xf32>
    %59 = arith.maximumf %57, %58 : vector<8x128xf32>
    %60 = vector.extract_strided_slice %59 {offsets = [0, 0], sizes = [8, 1], strides = [1, 1]} : vector<8x128xf32> to vector<8x1xf32>
    %c104 = arith.constant 104 : index
    %c0_17 = arith.constant 0 : index
    %61 = vector.load %arg1[%c104, %c0_17] : memref<248x128xf32, #tpu.memory_space<vmem>>, vector<8x128xf32>
    %62 = vector.broadcast %60 : vector<8x1xf32> to vector<8x128xf32>
    %63 = arith.mulf %62, %61 : vector<8x128xf32>
    %64 = vector.extract_strided_slice %59 {offsets = [0, 1], sizes = [8, 1], strides = [1, 1]} : vector<8x128xf32> to vector<8x1xf32>
    %c112 = arith.constant 112 : index
    %c0_18 = arith.constant 0 : index
    %65 = vector.load %arg1[%c112, %c0_18] : memref<248x128xf32, #tpu.memory_space<vmem>>, vector<8x128xf32>
    %66 = vector.broadcast %64 : vector<8x1xf32> to vector<8x128xf32>
    %67 = arith.mulf %66, %65 : vector<8x128xf32>
    %68 = arith.addf %63, %67 : vector<8x128xf32>
    %69 = vector.extract_strided_slice %59 {offsets = [0, 2], sizes = [8, 1], strides = [1, 1]} : vector<8x128xf32> to vector<8x1xf32>
    %c120 = arith.constant 120 : index
    %c0_19 = arith.constant 0 : index
    %70 = vector.load %arg1[%c120, %c0_19] : memref<248x128xf32, #tpu.memory_space<vmem>>, vector<8x128xf32>
    %71 = vector.broadcast %69 : vector<8x1xf32> to vector<8x128xf32>
    %72 = arith.mulf %71, %70 : vector<8x128xf32>
    %73 = arith.addf %68, %72 : vector<8x128xf32>
    %74 = vector.extract_strided_slice %59 {offsets = [0, 3], sizes = [8, 1], strides = [1, 1]} : vector<8x128xf32> to vector<8x1xf32>
    %c128 = arith.constant 128 : index
    %c0_20 = arith.constant 0 : index
    %75 = vector.load %arg1[%c128, %c0_20] : memref<248x128xf32, #tpu.memory_space<vmem>>, vector<8x128xf32>
    %76 = vector.broadcast %74 : vector<8x1xf32> to vector<8x128xf32>
    %77 = arith.mulf %76, %75 : vector<8x128xf32>
    %78 = arith.addf %73, %77 : vector<8x128xf32>
    %c136 = arith.constant 136 : index
    %c0_21 = arith.constant 0 : index
    %79 = vector.load %arg1[%c136, %c0_21] : memref<248x128xf32, #tpu.memory_space<vmem>>, vector<8x128xf32>
    %80 = arith.addf %78, %79 : vector<8x128xf32>
    %cst_22 = arith.constant 0.000000e+00 : f32
    %81 = vector.broadcast %cst_22 : f32 to vector<8x128xf32>
    %82 = arith.maximumf %80, %81 : vector<8x128xf32>
    %83 = vector.extract_strided_slice %82 {offsets = [0, 0], sizes = [8, 1], strides = [1, 1]} : vector<8x128xf32> to vector<8x1xf32>
    %c144 = arith.constant 144 : index
    %c0_23 = arith.constant 0 : index
    %84 = vector.load %arg1[%c144, %c0_23] : memref<248x128xf32, #tpu.memory_space<vmem>>, vector<8x128xf32>
    %85 = vector.broadcast %83 : vector<8x1xf32> to vector<8x128xf32>
    %86 = arith.mulf %85, %84 : vector<8x128xf32>
    %87 = vector.extract_strided_slice %82 {offsets = [0, 1], sizes = [8, 1], strides = [1, 1]} : vector<8x128xf32> to vector<8x1xf32>
    %c152 = arith.constant 152 : index
    %c0_24 = arith.constant 0 : index
    %88 = vector.load %arg1[%c152, %c0_24] : memref<248x128xf32, #tpu.memory_space<vmem>>, vector<8x128xf32>
    %89 = vector.broadcast %87 : vector<8x1xf32> to vector<8x128xf32>
    %90 = arith.mulf %89, %88 : vector<8x128xf32>
    %91 = arith.addf %86, %90 : vector<8x128xf32>
    %92 = vector.extract_strided_slice %82 {offsets = [0, 2], sizes = [8, 1], strides = [1, 1]} : vector<8x128xf32> to vector<8x1xf32>
    %c160 = arith.constant 160 : index
    %c0_25 = arith.constant 0 : index
    %93 = vector.load %arg1[%c160, %c0_25] : memref<248x128xf32, #tpu.memory_space<vmem>>, vector<8x128xf32>
    %94 = vector.broadcast %92 : vector<8x1xf32> to vector<8x128xf32>
    %95 = arith.mulf %94, %93 : vector<8x128xf32>
    %96 = arith.addf %91, %95 : vector<8x128xf32>
    %97 = vector.extract_strided_slice %82 {offsets = [0, 3], sizes = [8, 1], strides = [1, 1]} : vector<8x128xf32> to vector<8x1xf32>
    %c168 = arith.constant 168 : index
    %c0_26 = arith.constant 0 : index
    %98 = vector.load %arg1[%c168, %c0_26] : memref<248x128xf32, #tpu.memory_space<vmem>>, vector<8x128xf32>
    %99 = vector.broadcast %97 : vector<8x1xf32> to vector<8x128xf32>
    %100 = arith.mulf %99, %98 : vector<8x128xf32>
    %101 = arith.addf %96, %100 : vector<8x128xf32>
    %c176 = arith.constant 176 : index
    %c0_27 = arith.constant 0 : index
    %102 = vector.load %arg1[%c176, %c0_27] : memref<248x128xf32, #tpu.memory_space<vmem>>, vector<8x128xf32>
    %103 = arith.addf %101, %102 : vector<8x128xf32>
    %c0_28 = arith.constant 0 : index
    %c0_29 = arith.constant 0 : index
    %104 = vector.load %arg2[%c0_28, %c0_29] : memref<8x128xf32, #tpu.memory_space<vmem>>, vector<8x128xf32>
    tpu.vector_store %arg2[%c0_28, %c0_29], %103 {strides = array<i32>} : memref<8x128xf32, #tpu.memory_space<vmem>>, vector<8x128xf32>,
    return
  }
}

</mosaic_0001>

<llo_original>
// kernel: fwd.1
$region0: #{fwd.1}
  #allocation0 [shape = 'u32[]', space=smem, size = 0x4, offset = 0x4, fixed_abs, tag = 'smem constant byte address 0x4 - core index']
  #allocation1 [shape = 'u32[144,128]{1,0:T(1,128)}', space=vmem, size = 0x12000, scoped, tag = 'internal scratch']
  %s0 = inlined_call_operand.vmem [shape: f32[8,128], index: 0, kind: input, shape index: {}]
  %s1 = inlined_call_operand.hbm [shape: f32[248,128], index: 1, kind: input, shape index: {}]
  %s2 = inlined_call_operand.vmem [shape: f32[8,128], index: 2, kind: output, shape index: {}]
  %s3 = sld [smem:[#allocation0]]
  $region22: #{fwd.1} parent=0
    _
  %s5 = ssub.s32 1, %s3
  %s6 = scalar_select 0, %s5, %s3
  $region1: #{fwd.1} parent=0
    #allocation2 [shape = 'u8[126976]{0}', space=vmem, size = 0x1f000, scoped, tag = 'input window, operand 1, single buffered']
    #allocation3 [shape = 's32[1]{0}', space=sflag, size = 0x4, scoped, tag = 'scoped memory for fwd.1']
    %7 = vsyncpa [#allocation3], 0
    // Predicated region
    $region2: #{fwd.1} parent=1 // pred_check
      _
    $region3: #{fwd.1} parent=1 // pred_check_branch
      %9 = sbr.rel (0) target = $region5
    $region4: #{fwd.1} parent=1 // pred_region
      _
    $region5: #{fwd.1} parent=1 // pred_fallthru
      _
    // Predicated region
    $region6: #{fwd.1} parent=1 // pred_check
      _
    $region7: #{fwd.1} parent=1 // pred_check_branch
      %11 = sbr.rel (0) target = $region9
    $region8: #{fwd.1} parent=1 // pred_region
      %s13 = ssub.s32 3968, 3968
      %14 = vsyncadd [#allocation3], %s13
      %s15 = sshll.u32 [#allocation2], 4
      %s16 = int_to_ptr.vmem [resolvable:$true] %s15
      %21 = dma.hbm_to_vmem [thread:$0]  %s1, 3968, %s16, [#allocation3], 128, 128, 8
    $region9: #{fwd.1} parent=1 // pred_fallthru
      _
    // Predicated region
    $region10: #{fwd.1} parent=1 // pred_check
      _
    $region11: #{fwd.1} parent=1 // pred_check_branch
      %23 = sbr.rel (0) target = $region13
    $region12: #{fwd.1} parent=1 // pred_region
      %24 = dma.done [#allocation3], 3968
    $region13: #{fwd.1} parent=1 // pred_fallthru
      _
    %v25 = vld [vmem:[%s0] sm:$0xff]
    %v26 = vld [vmem:[#allocation2] sm:$0xff]
    %28 = vset.pattern.permute.xlu0 0
    %29 = vperm.xlu0 %28, %v25
    %v30 = vpop.permute.xlu0 %29
    %v32 = vmul.f32 %v30, %v26
    %v33 = vld [vmem:[#allocation2 + $0x8] sm:$0xff]
    %34 = vset.pattern.permute.xlu0 1
    %35 = vperm.xlu0 %34, %v25
    %v36 = vpop.permute.xlu0 %35
    %v38 = vmul.f32 %v36, %v33
    %v39 = vadd.f32 %v32, %v38
    %v40 = vld [vmem:[#allocation2 + $0x10] sm:$0xff]
    %v41 = vadd.f32 %v39, %v40
    %v42 = vmax.f32 %v41, 0.0
    %v43 = vld [vmem:[#allocation2 + $0x18] sm:$0xff]
    %45 = vset.pattern.permute.xlu0 0
    %46 = vperm.xlu0 %45, %v42
    %v47 = vpop.permute.xlu0 %46
    %v49 = vmul.f32 %v47, %v43
    %v50 = vld [vmem:[#allocation2 + $0x20] sm:$0xff]
    %51 = vset.pattern.permute.xlu0 1
    %52 = vperm.xlu0 %51, %v42
    %v53 = vpop.permute.xlu0 %52
    %v55 = vmul.f32 %v53, %v50
    %v56 = vadd.f32 %v49, %v55
    %v57 = vld [vmem:[#allocation2 + $0x28] sm:$0xff]
    %58 = vset.pattern.permute.xlu0 2
    %59 = vperm.xlu0 %58, %v42
    %v60 = vpop.permute.xlu0 %59
    %v62 = vmul.f32 %v60, %v57
    %v63 = vadd.f32 %v56, %v62
    %v64 = vld [vmem:[#allocation2 + $0x30] sm:$0xff]
    %65 = vset.pattern.permute.xlu0 3
    %66 = vperm.xlu0 %65, %v42
    %v67 = vpop.permute.xlu0 %66
    %v69 = vmul.f32 %v67, %v64
    %v70 = vadd.f32 %v63, %v69
    %v71 = vld [vmem:[#allocation2 + $0x38] sm:$0xff]
    %v72 = vadd.f32 %v70, %v71
    %v73 = vmax.f32 %v72, 0.0
    %v74 = vld [vmem:[#allocation2 + $0x40] sm:$0xff]
    %76 = vset.pattern.permute.xlu0 0
    %77 = vperm.xlu0 %76, %v73
    %v78 = vpop.permute.xlu0 %77
    %v80 = vmul.f32 %v78, %v74
    %v81 = vld [vmem:[#allocation2 + $0x48] sm:$0xff]
    %82 = vset.pattern.permute.xlu0 1
    %83 = vperm.xlu0 %82, %v73
    %v84 = vpop.permute.xlu0 %83
    %v86 = vmul.f32 %v84, %v81
    %v87 = vadd.f32 %v80, %v86
    %v88 = vld [vmem:[#allocation2 + $0x50] sm:$0xff]
    %89 = vset.pattern.permute.xlu0 2
    %90 = vperm.xlu0 %89, %v73
    %v91 = vpop.permute.xlu0 %90
    %v93 = vmul.f32 %v91, %v88
    %v94 = vadd.f32 %v87, %v93
    %v95 = vld [vmem:[#allocation2 + $0x58] sm:$0xff]
    %96 = vset.pattern.permute.xlu0 3
    %97 = vperm.xlu0 %96, %v73
    %v98 = vpop.permute.xlu0 %97
    %v100 = vmul.f32 %v98, %v95
    %v101 = vadd.f32 %v94, %v100
    %v102 = vld [vmem:[#allocation2 + $0x60] sm:$0xff]
    %v103 = vadd.f32 %v101, %v102
    %v104 = vmax.f32 %v103, 0.0
    %v105 = vld [vmem:[#allocation2 + $0x68] sm:$0xff]
    %107 = vset.pattern.permute.xlu0 0
    %108 = vperm.xlu0 %107, %v104
    %v109 = vpop.permute.xlu0 %108
    %v111 = vmul.f32 %v109, %v105
    %v112 = vld [vmem:[#allocation2 + $0x70] sm:$0xff]
    %113 = vset.pattern.permute.xlu0 1
    %114 = vperm.xlu0 %113, %v104
    %v115 = vpop.permute.xlu0 %114
    %v117 = vmul.f32 %v115, %v112
    %v118 = vadd.f32 %v111, %v117
    %v119 = vld [vmem:[#allocation2 + $0x78] sm:$0xff]
    %120 = vset.pattern.permute.xlu0 2
    %121 = vperm.xlu0 %120, %v104
    %v122 = vpop.permute.xlu0 %121
    %v124 = vmul.f32 %v122, %v119
    %v125 = vadd.f32 %v118, %v124
    %v126 = vld [vmem:[#allocation2 + $0x80] sm:$0xff]
    %127 = vset.pattern.permute.xlu0 3
    %128 = vperm.xlu0 %127, %v104
    %v129 = vpop.permute.xlu0 %128
    %v131 = vmul.f32 %v129, %v126
    %v132 = vadd.f32 %v125, %v131
    %v133 = vld [vmem:[#allocation2 + $0x88] sm:$0xff]
    %v134 = vadd.f32 %v132, %v133
    %v135 = vmax.f32 %v134, 0.0
    %v136 = vld [vmem:[#allocation2 + $0x90] sm:$0xff]
    %138 = vset.pattern.permute.xlu0 0
    %139 = vperm.xlu0 %138, %v135
    %v140 = vpop.permute.xlu0 %139
    %v142 = vmul.f32 %v140, %v136
    %v143 = vld [vmem:[#allocation2 + $0x98] sm:$0xff]
    %144 = vset.pattern.permute.xlu0 1
    %145 = vperm.xlu0 %144, %v135
    %v146 = vpop.permute.xlu0 %145
    %v148 = vmul.f32 %v146, %v143
    %v149 = vadd.f32 %v142, %v148
    %v150 = vld [vmem:[#allocation2 + $0xa0] sm:$0xff]
    %151 = vset.pattern.permute.xlu0 2
    %152 = vperm.xlu0 %151, %v135
    %v153 = vpop.permute.xlu0 %152
    %v155 = vmul.f32 %v153, %v150
    %v156 = vadd.f32 %v149, %v155
    %v157 = vld [vmem:[#allocation2 + $0xa8] sm:$0xff]
    %158 = vset.pattern.permute.xlu0 3
    %159 = vperm.xlu0 %158, %v135
    %v160 = vpop.permute.xlu0 %159
    %v162 = vmul.f32 %v160, %v157
    %v163 = vadd.f32 %v156, %v162
    %v164 = vld [vmem:[#allocation2 + $0xb0] sm:$0xff]
    %v165 = vadd.f32 %v163, %v164
    %166 = vst [vmem:[%s2] sm:$0xff] %v165
    // Predicated region
    $region14: #{fwd.1} parent=1 // pred_check
      _
    $region15: #{fwd.1} parent=1 // pred_check_branch
      %168 = sbr.rel (0) target = $region17
    $region16: #{fwd.1} parent=1 // pred_region
      _
    $region17: #{fwd.1} parent=1 // pred_fallthru
      _
    // Predicated region
    $region18: #{fwd.1} parent=1 // pred_check
      _
    $region19: #{fwd.1} parent=1 // pred_check_branch
      %170 = sbr.rel (0) target = $region21
    $region20: #{fwd.1} parent=1 // pred_region
      _
    $region21: #{fwd.1} parent=1 // pred_fallthru
      _
    %171 = vsyncpa [#allocation3], 1

</llo_original>
